<compile_context>
chip_gen: v5e
topology: v5e:2x2
jax: 0.10.0
libtpu: 0.0.40
codegen_flags: <defaults>
</compile_context>

<pallas_src>
import functools
import math

import jax
import jax.numpy as jnp
from jax import lax
from jax.experimental import pallas as pl
from jax.experimental.pallas import tpu as pltpu

LN_EPS = 1e-5  # torch.nn.LayerNorm default


# ----------------------------- Pallas kernels -----------------------------

def _ln_linear_kernel(x_ref, g_ref, b_ref, w_ref, bias_ref, o_ref, *, eps):
    """y = LayerNorm(x) @ w + bias   (ln_1 + in_project fused, one row tile)."""
    x = x_ref[...].astype(jnp.float32)
    mu = jnp.mean(x, axis=-1, keepdims=True)
    xc = x - mu
    var = jnp.mean(xc * xc, axis=-1, keepdims=True)
    xn = xc * lax.rsqrt(var + eps) * g_ref[...] + b_ref[...]
    y = jnp.dot(xn, w_ref[...], preferred_element_type=jnp.float32) + bias_ref[...]
    o_ref[...] = y.astype(o_ref.dtype)


def _gaussian_attn_kernel(x_ref, g_ref, b_ref, o_ref, attn_ref, zt_ref, *,
                          num_heads, head_dim, sigma, eps):
    """Per-head LayerNorm + Gaussian pairwise sums + softmax + attn @ x.

    x_ref    : (1, S, D)  in_project output for one batch element (lane dense).
    o_ref    : (1, S, D)  output slab, heads concatenated on the lane axis.
    attn_ref : (S, S) f32 VMEM accumulator for the pairwise Gaussian sums.
    zt_ref   : (E, S) f32 VMEM scratch: pre-scaled, transposed head activations.
    """
    E = head_dim
    S = x_ref.shape[1]
    pre_scale = 1.0 / (math.sqrt(2.0) * float(sigma))   # z = xn / (sqrt(2)*sigma)
    un_scale = math.sqrt(2.0) * float(sigma)            # attn@xn == (attn@z)*un_scale
    inv_head_dim = 1.0 / float(E)

    xall = x_ref[0].astype(jnp.float32)                 # (S, D) one dense load
    gamma = g_ref[...].astype(jnp.float32)               # (1, E)
    beta = b_ref[...].astype(jnp.float32)                # (1, E)
    # Lane-index grid used to extract a single z column in (S, 1) sublane form
    # with a select + lane reduce (avoids dynamic lane slicing entirely).
    lane_ids = lax.broadcasted_iota(jnp.int32, (S, E), 1)

    # Heads: static Python loop (H is small; static lane slices keep the
    # per-head load and the per-head output store cheap).  The E / E^2
    # component loops below are lax.fori_loop with dynamic indices.
    for h in range(num_heads):
        xh = xall[:, h * E:(h + 1) * E]                   # (S, E) static slice
        # per-head LayerNorm over head_dim
        mu = jnp.mean(xh, axis=-1, keepdims=True)
        xc = xh - mu
        var = jnp.mean(xc * xc, axis=-1, keepdims=True)
        xn = xc * lax.rsqrt(var + eps) * gamma + beta     # (S, E)
        z = xn * pre_scale                                # pre-scaled once per head

        zt_ref[...] = z.T                                 # (E, S): one XLU transpose
        attn_ref[...] = jnp.zeros_like(attn_ref)

        # attn[i, j] = sum_{p,q} exp(-(z[i,p] - z[j,q])^2)
        # M_pq[i,j] = exp(-(z[i,p]-z[j,q])^2), and M_qp == M_pq^T, so only
        # p <= q is evaluated: the diagonal once, off-diagonal as M + M^T.
        # Every tile is a lane-dense (S, S) block; no (S, S, E) intermediate.
        def p_body(p, carry):
            # column p of z as (S, 1): iota-select + lane reduce (hoisted out
            # of the q loop; no dynamic lane slice).
            colp = jnp.sum(jnp.where(lane_ids == p, z, 0.0),
                           axis=-1, keepdims=True)        # (S, 1)
            rowp = zt_ref[pl.ds(p, 1), :]                  # (1, S) sublane read
            d = colp - rowp                                # (S, S)
            attn_ref[...] += jnp.exp(-(d * d))             # diagonal term q == p

            def q_body(q, qcarry):
                @pl.when(q > p)
                def _():
                    rowq = zt_ref[pl.ds(q, 1), :]          # (1, S)
                    dq = colp - rowq                       # (S, S) lane dense
                    m = jnp.exp(-(dq * dq))
                    attn_ref[...] += m + m.T               # M_pq + M_qp (XLU mirror)
                return qcarry

            lax.fori_loop(0, E, q_body, 0)
            return carry

        lax.fori_loop(0, E, p_body, 0)

        attn = attn_ref[...] * inv_head_dim
        # softmax over keys; denominator reciprocal runs on the EUP slot.
        mx = jnp.max(attn, axis=-1, keepdims=True)
        e = jnp.exp(attn - mx)
        w = e * pl.reciprocal(jnp.sum(e, axis=-1, keepdims=True), approx=True)

        # attn_weights @ xn  ==  (attn_weights @ z) * (sqrt(2)*sigma)
        out_h = jnp.dot(w, z, preferred_element_type=jnp.float32) * un_scale
        # Write this head's slice straight into the output block (no concat,
        # no H x (S, E) results kept live); HBM writeback stays one lane-dense
        # (S, D) block per grid step.
        o_ref[0, :, h * E:(h + 1) * E] = out_h.astype(o_ref.dtype)


def _proj_res_ln_mlp_kernel(a_ref, r_ref, wo_ref, bo_ref, g2_ref, b2_ref,
                            w1_ref, b1_ref, w2_ref, bm2_ref, o_ref, *, eps):
    """o = GELU(LN(attn @ w_out + b_out + residual) @ w_fc1 + b_fc1) @ w_fc2 + b_fc2.

    out_project + residual + ln_2 + fc1 + GELU + fc2 fused per row tile, so the
    (rows, mlp_dim) hidden activations never round-trip HBM.
    """
    a = a_ref[...].astype(jnp.float32)
    x = jnp.dot(a, wo_ref[...], preferred_element_type=jnp.float32) + bo_ref[...]
    x = x + r_ref[...].astype(jnp.float32)                 # residual with raw inputs
    mu = jnp.mean(x, axis=-1, keepdims=True)
    xc = x - mu
    var = jnp.mean(xc * xc, axis=-1, keepdims=True)
    y = xc * lax.rsqrt(var + eps) * g2_ref[...] + b2_ref[...]
    h = jnp.dot(y, w1_ref[...], preferred_element_type=jnp.float32) + b1_ref[...]
    h = jax.nn.gelu(h)                                      # tanh-approx GELU (EUP)
    out = jnp.dot(h, w2_ref[...], preferred_element_type=jnp.float32) + bm2_ref[...]
    o_ref[...] = out.astype(o_ref.dtype)


# ----------------------------- pallas_call wrappers -----------------------------

# Row tile for the two row-tiled matmul kernels.  256 keeps the fused MLP
# kernel's double-buffered working set inside v7x's 64 MiB VMEM at realistic
# D / mlp_dim; on v5e/v6e (128 MiB) a larger tile, bf16 weights and
# single-buffered weight specs are the next levers.
_ROW_BLOCK = 256


def _row_block(R):
    return R if R <= _ROW_BLOCK else _ROW_BLOCK


def ln_linear(x2d, g, b, w, bias, eps=LN_EPS):
    R, D = x2d.shape
    Dout = w.shape[1]
    rb = _row_block(R)
    return pl.pallas_call(
        functools.partial(_ln_linear_kernel, eps=eps),
        grid=(pl.cdiv(R, rb),),
        in_specs=[
            pl.BlockSpec((rb, D), lambda i: (i, 0)),
            pl.BlockSpec((1, D), lambda i: (0, 0)),
            pl.BlockSpec((1, D), lambda i: (0, 0)),
            pl.BlockSpec((D, Dout), lambda i: (0, 0)),
            pl.BlockSpec((1, Dout), lambda i: (0, 0)),
        ],
        out_specs=pl.BlockSpec((rb, Dout), lambda i: (i, 0)),
        out_shape=jax.ShapeDtypeStruct((R, Dout), x2d.dtype),
        compiler_params=pltpu.CompilerParams(dimension_semantics=("parallel",)),
    )(x2d, g.reshape(1, D), b.reshape(1, D), w, bias.reshape(1, Dout))


def gaussian_attention(xp, lnh_g, lnh_b, num_heads, sigma, eps=LN_EPS):
    """xp: (B, S, D) in_project output. Returns (B, S, D) attention output."""
    B, S, D = xp.shape
    E = D // num_heads
    kern = functools.partial(
        _gaussian_attn_kernel,
        num_heads=num_heads, head_dim=E, sigma=float(sigma), eps=eps)
    # TODO(synk): for very long S add a query-row grid axis (grid=(B, S//Tq))
    #             with a resident (1, S, D) key slab; that tiling gives up the
    #             (p, q) transpose-mirror trick for off-diagonal row tiles.
    return pl.pallas_call(
        kern,
        grid=(B,),
        in_specs=[
            pl.BlockSpec((1, S, D), lambda bidx: (bidx, 0, 0)),
            pl.BlockSpec((1, E), lambda bidx: (0, 0)),
            pl.BlockSpec((1, E), lambda bidx: (0, 0)),
        ],
        out_specs=pl.BlockSpec((1, S, D), lambda bidx: (bidx, 0, 0)),
        out_shape=jax.ShapeDtypeStruct((B, S, D), xp.dtype),
        scratch_shapes=[
            pltpu.VMEM((S, S), jnp.float32),   # pairwise-sum accumulator
            pltpu.VMEM((E, S), jnp.float32),   # pre-scaled head, transposed
        ],
        compiler_params=pltpu.CompilerParams(dimension_semantics=("parallel",)),
    )(xp, lnh_g.reshape(1, E), lnh_b.reshape(1, E))


def proj_res_ln_mlp(attn2d, res2d, w_out, b_out, g2, b2, w_fc1, b_fc1,
                    w_fc2, b_fc2, eps=LN_EPS):
    R, D = attn2d.shape
    M = w_fc1.shape[1]
    rb = _row_block(R)
    return pl.pallas_call(
        functools.partial(_proj_res_ln_mlp_kernel, eps=eps),
        grid=(pl.cdiv(R, rb),),
        in_specs=[
            pl.BlockSpec((rb, D), lambda i: (i, 0)),   # attention output rows
            pl.BlockSpec((rb, D), lambda i: (i, 0)),   # residual (raw input) rows
            pl.BlockSpec((D, D), lambda i: (0, 0)),    # w_out
            pl.BlockSpec((1, D), lambda i: (0, 0)),    # b_out
            pl.BlockSpec((1, D), lambda i: (0, 0)),    # ln2 gamma
            pl.BlockSpec((1, D), lambda i: (0, 0)),    # ln2 beta
            pl.BlockSpec((D, M), lambda i: (0, 0)),    # w_fc1
            pl.BlockSpec((1, M), lambda i: (0, 0)),    # b_fc1
            pl.BlockSpec((M, D), lambda i: (0, 0)),    # w_fc2
            pl.BlockSpec((1, D), lambda i: (0, 0)),    # b_fc2
        ],
        out_specs=pl.BlockSpec((rb, D), lambda i: (i, 0)),
        out_shape=jax.ShapeDtypeStruct((R, D), attn2d.dtype),
        compiler_params=pltpu.CompilerParams(dimension_semantics=("parallel",)),
    )(attn2d, res2d, w_out, b_out.reshape(1, D), g2.reshape(1, D),
      b2.reshape(1, D), w_fc1, b_fc1.reshape(1, M), w_fc2, b_fc2.reshape(1, D))


# ----------------------------- model glue -----------------------------

def init_params(key, model_dim, num_heads, mlp_dim):
    head_dim = model_dim // num_heads
    ks = jax.random.split(key, 4)

    def lin(k, din, dout):
        kw, kb = jax.random.split(k)
        lim = 1.0 / jnp.sqrt(din)
        w = jax.random.uniform(kw, (din, dout), jnp.float32, -lim, lim)
        b = jax.random.uniform(kb, (dout,), jnp.float32, -lim, lim)
        return w, b

    p = {
        "ln1_g": jnp.ones((model_dim,), jnp.float32),
        "ln1_b": jnp.zeros((model_dim,), jnp.float32),
        "ln2_g": jnp.ones((model_dim,), jnp.float32),
        "ln2_b": jnp.zeros((model_dim,), jnp.float32),
        "lnh_g": jnp.ones((head_dim,), jnp.float32),
        "lnh_b": jnp.zeros((head_dim,), jnp.float32),
    }
    p["w_in"], p["b_in"] = lin(ks[0], model_dim, model_dim)
    p["w_out"], p["b_out"] = lin(ks[1], model_dim, model_dim)
    p["w_fc1"], p["b_fc1"] = lin(ks[2], model_dim, mlp_dim)
    p["w_fc2"], p["b_fc2"] = lin(ks[3], mlp_dim, model_dim)
    return p


def gaussian_block_forward(inputs, params, num_heads, sigma=1.0):
    """Gaussian_Block.forward (all nn.Dropout layers are identity in eval mode)."""
    B, S, D = inputs.shape
    R = B * S
    x2 = inputs.reshape(R, D)

    # ln_1 + in_project fused, row-tiled.
    xp = ln_linear(x2, params["ln1_g"], params["ln1_b"],
                   params["w_in"], params["b_in"]).reshape(B, S, D)

    # per-head LN + Gaussian attention, fused per batch element.
    attn = gaussian_attention(xp, params["lnh_g"], params["lnh_b"],
                              num_heads, sigma)                       # (B, S, D)

    # out_project + residual + ln_2 + fc1 + GELU + fc2 fused, row-tiled.
    y = proj_res_ln_mlp(attn.reshape(R, D), x2,
                        params["w_out"], params["b_out"],
                        params["ln2_g"], params["ln2_b"],
                        params["w_fc1"], params["b_fc1"],
                        params["w_fc2"], params["b_fc2"])             # (R, D)
    return y.reshape(B, S, D)


# ----------------------------- plain-JAX reference -----------------------------

def reference_forward(inputs, params, num_heads, sigma=1.0):
    def ln(x, g, b):
        mu = jnp.mean(x, -1, keepdims=True)
        var = jnp.mean((x - mu) ** 2, -1, keepdims=True)
        return (x - mu) * lax.rsqrt(var + LN_EPS) * g + b

    B, S, D = inputs.shape
    H = num_heads
    hd = D // H
    x = ln(inputs, params["ln1_g"], params["ln1_b"])
    xp = x @ params["w_in"] + params["b_in"]
    xp = xp.reshape(B, S, H, hd).transpose(0, 2, 1, 3)
    xn = ln(xp, params["lnh_g"], params["lnh_b"])
    xg = xn.reshape(B * H, S, hd)
    diff = xg[:, :, None, :, None] - xg[:, None, :, None, :]      # (BH,S,S,E,E)
    base = jnp.exp(-(diff ** 2) / (2.0 * sigma ** 2))
    attn = base.sum(axis=(-1, -2)) / hd
    attn = jax.nn.softmax(attn, axis=-1)
    ao = jnp.einsum("bij,bjd->bid", attn, xg)
    ao = ao.reshape(B, H, S, hd).transpose(0, 2, 1, 3).reshape(B, S, D)
    ao = ao @ params["w_out"] + params["b_out"]
    x = ao + inputs
    y = ln(x, params["ln2_g"], params["ln2_b"])
    h = jax.nn.gelu(y @ params["w_fc1"] + params["b_fc1"])
    return h @ params["w_fc2"] + params["b_fc2"]


# ----------------------------- main -----------------------------

if __name__ == "__main__":
    B, S, MODEL_DIM, NUM_HEADS, MLP_DIM = 2, 8, 32, 4, 64
    SIGMA = 1.0

    key = jax.random.PRNGKey(0)
    kx, kp = jax.random.split(key)
    x = jax.random.normal(kx, (B, S, MODEL_DIM), jnp.float32)
    params = init_params(kp, MODEL_DIM, NUM_HEADS, MLP_DIM)

    out = gaussian_block_forward(x, params, NUM_HEADS, sigma=SIGMA)
    out = jax.block_until_ready(out)
    assert out.shape == (B, S, MODEL_DIM)

    ref = reference_forward(x, params, NUM_HEADS, sigma=SIGMA)
    err = float(jnp.max(jnp.abs(out - ref)))
    # f32 everywhere; remaining slack is budgeted for the approximate softmax
    # reciprocal (pl.reciprocal(approx=True), ~1e-3 after propagation).
    if not jnp.allclose(out, ref, atol=5e-3, rtol=5e-3):
        raise AssertionError(f"mismatch vs reference, max abs err = {err}")

    print("KERNEL_OK")
</pallas_src>

<mosaic_0001>
module attributes {stable_mosaic.version = 11 : i64} {
  func.func @_ln_linear_kernel(%arg0: i32, %arg1: memref<16x32xf32, #tpu.memory_space<vmem>>, %arg2: memref<1x32xf32, #tpu.memory_space<vmem>>, %arg3: memref<1x32xf32, #tpu.memory_space<vmem>>, %arg4: memref<32x32xf32, #tpu.memory_space<vmem>>, %arg5: memref<1x32xf32, #tpu.memory_space<vmem>>, %arg6: memref<16x32xf32, #tpu.memory_space<vmem>>) attributes {dimension_semantics = [#tpu.dimension_semantics<parallel>], iteration_bounds = array<i64: 1>, scalar_prefetch = 0 : i64, scratch_operands = 0 : i64, tpu.core_type = #tpu.core_type<tc>, window_params = [{transform_indices = @transform_0, window_bounds = array<i64: 16, 32>}, {pipeline_mode = #tpu.pipeline_mode<synchronous>, transform_indices = @transform_1, window_bounds = array<i64: 1, 32>}, {pipeline_mode = #tpu.pipeline_mode<synchronous>, transform_indices = @transform_2, window_bounds = array<i64: 1, 32>}, {pipeline_mode = #tpu.pipeline_mode<synchronous>, transform_indices = @transform_3, window_bounds = array<i64: 32, 32>}, {pipeline_mode = #tpu.pipeline_mode<synchronous>, transform_indices = @transform_4, window_bounds = array<i64: 1, 32>}, {transform_indices = @transform_5, window_bounds = array<i64: 16, 32>}]} {
    %c0 = arith.constant 0 : index
    %c0_0 = arith.constant 0 : index
    %0 = vector.load %arg1[%c0, %c0_0] : memref<16x32xf32, #tpu.memory_space<vmem>>, vector<16x32xf32>
    %cst = arith.constant dense<0.000000e+00> : vector<16xf32>
    %1 = vector.multi_reduction <add>, %0, %cst [1] : vector<16x32xf32> to vector<16xf32>
    %2 = vector.shape_cast %1 : vector<16xf32> to vector<16x1xf32>
    %cst_1 = arith.constant 3.200000e+01 : f32
    %3 = vector.broadcast %cst_1 : f32 to vector<16x1xf32>
    %4 = arith.divf %2, %3 : vector<16x1xf32>
    %5 = vector.broadcast %4 : vector<16x1xf32> to vector<16x32xf32>
    %6 = arith.subf %0, %5 : vector<16x32xf32>
    %7 = arith.mulf %6, %6 : vector<16x32xf32>
    %cst_2 = arith.constant dense<0.000000e+00> : vector<16xf32>
    %8 = vector.multi_reduction <add>, %7, %cst_2 [1] : vector<16x32xf32> to vector<16xf32>
    %9 = vector.shape_cast %8 : vector<16xf32> to vector<16x1xf32>
    %cst_3 = arith.constant 3.200000e+01 : f32
    %10 = vector.broadcast %cst_3 : f32 to vector<16x1xf32>
    %11 = arith.divf %9, %10 : vector<16x1xf32>
    %cst_4 = arith.constant 9.99999974E-6 : f32
    %12 = vector.broadcast %cst_4 : f32 to vector<16x1xf32>
    %13 = arith.addf %11, %12 : vector<16x1xf32>
    %14 = math.rsqrt %13 : vector<16x1xf32>
    %15 = vector.broadcast %14 : vector<16x1xf32> to vector<16x32xf32>
    %16 = arith.mulf %6, %15 : vector<16x32xf32>
    %c0_5 = arith.constant 0 : index
    %c0_6 = arith.constant 0 : index
    %17 = vector.load %arg2[%c0_5, %c0_6] : memref<1x32xf32, #tpu.memory_space<vmem>>, vector<1x32xf32>
    %18 = vector.broadcast %17 : vector<1x32xf32> to vector<16x32xf32>
    %19 = arith.mulf %16, %18 : vector<16x32xf32>
    %c0_7 = arith.constant 0 : index
    %c0_8 = arith.constant 0 : index
    %20 = vector.load %arg3[%c0_7, %c0_8] : memref<1x32xf32, #tpu.memory_space<vmem>>, vector<1x32xf32>
    %21 = vector.broadcast %20 : vector<1x32xf32> to vector<16x32xf32>
    %22 = arith.addf %19, %21 : vector<16x32xf32>
    %c0_9 = arith.constant 0 : index
    %c0_10 = arith.constant 0 : index
    %23 = vector.load %arg4[%c0_9, %c0_10] : memref<32x32xf32, #tpu.memory_space<vmem>>, vector<32x32xf32>
    %cst_11 = arith.constant dense<0.000000e+00> : vector<16x32xf32>
    %24 = tpu.matmul %22, %23, %cst_11 {dimension_numbers = #tpu.dot_dimension_numbers<[1], [0], [0], [1], [0, 0, 1, 1], [], []>} : vector<16x32xf32>, vector<32x32xf32>, vector<16x32xf32> -> vector<16x32xf32>
    %c0_12 = arith.constant 0 : index
    %c0_13 = arith.constant 0 : index
    %25 = vector.load %arg5[%c0_12, %c0_13] : memref<1x32xf32, #tpu.memory_space<vmem>>, vector<1x32xf32>
    %26 = vector.broadcast %25 : vector<1x32xf32> to vector<16x32xf32>
    %27 = arith.addf %24, %26 : vector<16x32xf32>
    %c0_14 = arith.constant 0 : index
    %c0_15 = arith.constant 0 : index
    %28 = vector.load %arg6[%c0_14, %c0_15] : memref<16x32xf32, #tpu.memory_space<vmem>>, vector<16x32xf32>
    tpu.vector_store %arg6[%c0_14, %c0_15], %27 {strides = array<i32>} : memref<16x32xf32, #tpu.memory_space<vmem>>, vector<16x32xf32>,
    return
  }
  func.func @transform_0(%arg0: i32) -> (i32, i32) {
    %c0_i32 = arith.constant 0 : i32
    %c0_i32_0 = arith.constant 0 : i32
    return %arg0, %c0_i32 : i32, i32
  }
  func.func @transform_1(%arg0: i32) -> (i32, i32) {
    %c0_i32 = arith.constant 0 : i32
    %c0_i32_0 = arith.constant 0 : i32
    %c0_i32_1 = arith.constant 0 : i32
    return %c0_i32, %c0_i32_0 : i32, i32
  }
  func.func @transform_2(%arg0: i32) -> (i32, i32) {
    %c0_i32 = arith.constant 0 : i32
    %c0_i32_0 = arith.constant 0 : i32
    %c0_i32_1 = arith.constant 0 : i32
    return %c0_i32, %c0_i32_0 : i32, i32
  }
  func.func @transform_3(%arg0: i32) -> (i32, i32) {
    %c0_i32 = arith.constant 0 : i32
    %c0_i32_0 = arith.constant 0 : i32
    %c0_i32_1 = arith.constant 0 : i32
    return %c0_i32, %c0_i32_0 : i32, i32
  }
  func.func @transform_4(%arg0: i32) -> (i32, i32) {
    %c0_i32 = arith.constant 0 : i32
    %c0_i32_0 = arith.constant 0 : i32
    %c0_i32_1 = arith.constant 0 : i32
    return %c0_i32, %c0_i32_0 : i32, i32
  }
  func.func @transform_5(%arg0: i32) -> (i32, i32) {
    %c0_i32 = arith.constant 0 : i32
    %c0_i32_0 = arith.constant 0 : i32
    return %arg0, %c0_i32 : i32, i32
  }
}

</mosaic_0001>

<llo_original>
// kernel: tpu_custom_call.1
$region0: #{tpu_custom_call.1}
  #allocation0 [shape = 'u32[]', space=smem, size = 0x4, offset = 0x4, fixed_abs, tag = 'smem constant byte address 0x4 - core index']
  #allocation1 [shape = 'u32[72,128]{1,0:T(1,128)}', space=vmem, size = 0x9000, scoped, tag = 'internal scratch']
  %s0 = inlined_call_operand.hbm [shape: f32[16,32], index: 0, kind: input, shape index: {}]
  %s1 = inlined_call_operand.hbm [shape: f32[1,32], index: 1, kind: input, shape index: {}]
  %s2 = inlined_call_operand.vmem [shape: f32[1,32], index: 2, kind: input, shape index: {}]
  %s3 = inlined_call_operand.hbm [shape: f32[32,32], index: 3, kind: input, shape index: {}]
  %s4 = inlined_call_operand.vmem [shape: f32[1,32], index: 4, kind: input, shape index: {}]
  %s5 = inlined_call_operand.hbm [shape: f32[16,32], index: 5, kind: output, shape index: {}]
  %s6 = sld [smem:[#allocation0]]
  $region42: #{tpu_custom_call.1} parent=0
    _
  %s8 = ssub.s32 1, %s6
  %s9 = scalar_select 0, %s8, %s6
  $region1: #{tpu_custom_call.1} parent=0
    #allocation2 [shape = 'u8[8192]{0}', space=vmem, size = 0x2000, scoped, tag = 'input window, operand 0, single buffered']
    #allocation3 [shape = 's32[1]{0}', space=sflag, size = 0x4, scoped, tag = 'scoped memory for tpu_custom_call.1']
    #allocation4 [shape = 's32[1]{0}', space=sflag, size = 0x4, scoped, tag = 'scoped memory for tpu_custom_call.1']
    #allocation5 [shape = 'u8[512]{0}', space=vmem, size = 0x400, scoped, tag = 'input window, operand 1, single buffered']
    #allocation6 [shape = 's32[1]{0}', space=sflag, size = 0x4, scoped, tag = 'scoped memory for tpu_custom_call.1']
    #allocation7 [shape = 'u8[16384]{0}', space=vmem, size = 0x4000, scoped, tag = 'input window, operand 3, single buffered']
    #allocation8 [shape = 'u8[8192]{0}', space=vmem, size = 0x2000, scoped, tag = 'output window, operand 0, single buffered']
    %10 = vsyncpa [#allocation3], 0
    %11 = vsyncpa [#allocation6], 0
    %12 = vsyncpa [#allocation4], 0
    // Predicated region
    $region2: #{tpu_custom_call.1} parent=1 // pred_check
      _
    $region3: #{tpu_custom_call.1} parent=1 // pred_check_branch
      %14 = sbr.rel (0) target = $region5
    $region4: #{tpu_custom_call.1} parent=1 // pred_region
      %16 = vsyncadd [#allocation3], 0
      %s17 = sshll.u32 %s0, 4
      %s18 = int_to_ptr.hbm [resolvable:$true] %s17
      %s19 = sshll.u32 [#allocation2], 4
      %s20 = int_to_ptr.vmem [resolvable:$true] %s19
      %25 = dma.hbm_to_vmem [thread:$0]  %s18, 256, %s20, [#allocation3], 128, 128, 8
    $region5: #{tpu_custom_call.1} parent=1 // pred_fallthru
      _
    // Predicated region
    $region6: #{tpu_custom_call.1} parent=1 // pred_check
      _
    $region7: #{tpu_custom_call.1} parent=1 // pred_check_branch
      %27 = sbr.rel (0) target = $region9
    $region8: #{tpu_custom_call.1} parent=1 // pred_region
      %29 = vsyncadd [#allocation6], 0
      %s31 = sshll.u32 %s1, 4
      %s32 = int_to_ptr.hbm [resolvable:$true] %s31
      %s33 = sshll.u32 [#allocation5], 4
      %s34 = int_to_ptr.vmem [resolvable:$true] %s33
      %36 = dma.hbm_to_vmem [thread:$0]  %s32, 16, %s34, [#allocation6]
    $region9: #{tpu_custom_call.1} parent=1 // pred_fallthru
      _
    // Predicated region
    $region10: #{tpu_custom_call.1} parent=1 // pred_check
      _
    $region11: #{tpu_custom_call.1} parent=1 // pred_check_branch
      %38 = sbr.rel (0) target = $region13
    $region12: #{tpu_custom_call.1} parent=1 // pred_region
      _
    $region13: #{tpu_custom_call.1} parent=1 // pred_fallthru
      _
    // Predicated region
    $region14: #{tpu_custom_call.1} parent=1 // pred_check
      _
    $region15: #{tpu_custom_call.1} parent=1 // pred_check_branch
      %40 = sbr.rel (0) target = $region17
    $region16: #{tpu_custom_call.1} parent=1 // pred_region
      %42 = vsyncadd [#allocation6], 0
      %s43 = sshll.u32 %s3, 4
      %s44 = int_to_ptr.hbm [resolvable:$true] %s43
      %s45 = sshll.u32 [#allocation7], 4
      %s46 = int_to_ptr.vmem [resolvable:$true] %s45
      %51 = dma.hbm_to_vmem [thread:$0]  %s44, 512, %s46, [#allocation6], 128, 128, 8
    $region17: #{tpu_custom_call.1} parent=1 // pred_fallthru
      _
    // Predicated region
    $region18: #{tpu_custom_call.1} parent=1 // pred_check
      _
    $region19: #{tpu_custom_call.1} parent=1 // pred_check_branch
      %53 = sbr.rel (0) target = $region21
    $region20: #{tpu_custom_call.1} parent=1 // pred_region
      _
    $region21: #{tpu_custom_call.1} parent=1 // pred_fallthru
      _
    // Predicated region
    $region22: #{tpu_custom_call.1} parent=1 // pred_check
      _
    $region23: #{tpu_custom_call.1} parent=1 // pred_check_branch
      %55 = sbr.rel (0) target = $region25
    $region24: #{tpu_custom_call.1} parent=1 // pred_region
      %57 = dma.done [#allocation3], 256
    $region25: #{tpu_custom_call.1} parent=1 // pred_fallthru
      _
    // Predicated region
    $region26: #{tpu_custom_call.1} parent=1 // pred_check
      _
    $region27: #{tpu_custom_call.1} parent=1 // pred_check_branch
      %59 = sbr.rel (0) target = $region29
    $region28: #{tpu_custom_call.1} parent=1 // pred_region
      %61 = dma.done [#allocation6], 16
    $region29: #{tpu_custom_call.1} parent=1 // pred_fallthru
      _
    // Predicated region
    $region30: #{tpu_custom_call.1} parent=1 // pred_check
      _
    $region31: #{tpu_custom_call.1} parent=1 // pred_check_branch
      %63 = sbr.rel (0) target = $region33
    $region32: #{tpu_custom_call.1} parent=1 // pred_region
      %65 = dma.done [#allocation6], 512
    $region33: #{tpu_custom_call.1} parent=1 // pred_fallthru
      _
    %v66 = vld [vmem:[#allocation2] sm:$0xff]
    %v67 = vld [vmem:[#allocation2 + $0x8] sm:$0xff]
    %vm68 = vcmask 261120
    %v69 = vsel %vm68, %v66, 0.0
    %70 = vadd.xlane.f32.xlu0 %v69
    %v71 = vpop.xlane.xlu0 %70
    %v72 = vsel %vm68, %v67, 0.0
    %73 = vadd.xlane.f32.xlu0 %v72
    %v74 = vpop.xlane.xlu0 %73
    %v75 = vrcp.pop 32.0
    %v76 = vmul.f32 32.0, %v75
    %v77 = vsub.f32 1.0, %v76
    %v78 = vmul.f32 %v75, %v77
    %v79 = vadd.f32 %v75, %v78
    %vm80 = vweird.f32 %v75
    %v81 = vsel %vm80, %v75, %v79
    %v82 = vmul.f32 %v71, %v81
    %v83 = vmul.f32 %v74, %v81
    %v84 = vsub.f32 %v66, %v82
    %v85 = vsub.f32 %v67, %v83
    %v86 = vmul.f32 %v84, %v84
    %v87 = vmul.f32 %v85, %v85
    %v88 = vsel %vm68, %v86, 0.0
    %89 = vadd.xlane.f32.xlu0 %v88
    %v90 = vpop.xlane.xlu0 %89
    %v91 = vsel %vm68, %v87, 0.0
    %92 = vadd.xlane.f32.xlu0 %v91
    %v93 = vpop.xlane.xlu0 %92
    %v94 = vmul.f32 %v90, %v81
    %v95 = vmul.f32 %v93, %v81
    %v96 = vadd.f32 %v94, 1e-05
    %v97 = vadd.f32 %v95, 1e-05
    %v98 = vrsqrt.pop %v96
    %v99 = vmul.f32 %v98, %v96
    %v100 = vmul.f32 %v99, %v98
    %v101 = vmul.f32 0.5, %v100
    %v102 = vsub.f32 1.5, %v101
    %v103 = vmul.f32 %v98, %v102
    %vm104 = vweird.f32 %v96
    %vm105 = vweird.f32 %v98
    %vm106 = vmor %vm104, %vm105
    %v107 = vsel %vm106, %v98, %v103
    %v108 = vrsqrt.pop %v97
    %v109 = vmul.f32 %v108, %v97
    %v110 = vmul.f32 %v109, %v108
    %v111 = vmul.f32 0.5, %v110
    %v112 = vsub.f32 1.5, %v111
    %v113 = vmul.f32 %v108, %v112
    %vm114 = vweird.f32 %v97
    %vm115 = vweird.f32 %v108
    %vm116 = vmor %vm114, %vm115
    %v117 = vsel %vm116, %v108, %v113
    %v118 = vmul.f32 %v84, %v107
    %v119 = vmul.f32 %v85, %v117
    %v120 = vld [vmem:[#allocation5] sm:$0x1]
    %v122 = vperm.slane %v120, 0
    %v124 = vmul.f32 %v118, %v122
    %v125 = vmul.f32 %v119, %v122
    %v126 = vld [vmem:[%s2] sm:$0x1]
    %v128 = vperm.slane %v126, 0
    %v130 = vadd.f32 %v124, %v128
    %v131 = vadd.f32 %v125, %v128
    %v132 = vld [vmem:[#allocation7] sm:$0xff]
    %v133 = vld [vmem:[#allocation7 + $0x8] sm:$0xff]
    %v134 = vld [vmem:[#allocation7 + $0x10] sm:$0xff]
    %v135 = vld [vmem:[#allocation7 + $0x18] sm:$0xff]
    %v136 = vld [vmem:[%s4] sm:$0x1]
    %v138 = vperm.slane %v136, 0
    %v141 = vsel %vm68, %v130, 0
    %v144 = vsel %vm68, %v131, 0
    %146 = vmatpush.msra.mxu0 0.0
    %147 = vmatpush.msra.mxu0 0.0
    %148 = vmatpush.msra.mxu0 0.0
    %149 = vmatpush.msra.mxu0 0.0
    %150 = vmatpush.msra.mxu0 0.0
    %151 = vmatpush.msra.mxu0 0.0
    %152 = vmatpush.msra.mxu0 0.0
    %153 = vmatpush.msra.mxu0 0.0
    %154 = vmatpush.msra.mxu0 0.0
    %155 = vmatpush.msra.mxu0 0.0
    %156 = vmatpush.msra.mxu0 0.0
    %157 = vmatpush.msra.mxu0 0.0
    %158 = vmatpush.msra.mxu0 %v135
    %159 = vmatpush.msra.mxu0 %v134
    %160 = vmatpush.msra.mxu0 %v133
    %161 = vmatpush.msra.mxu0 %v132
    %162 = vmatmul.f32.gmra.mxu0 %v141
    %v163 = vpop.f32.mrf.mxu0
    %v164 = vadd.f32 %v138, %v163
    %165 = vmatmul.f32.gmra.mxu0 %v144
    %v166 = vpop.f32.mrf.mxu0
    %v167 = vadd.f32 %v138, %v166
    %168 = vdwg.mxu0
    %169 = vst.msk [vmem:[#allocation8] sm:$0xff] %vm68, %v164
    %170 = vst.msk [vmem:[#allocation8 + $0x8] sm:$0xff] %vm68, %v167
    // Predicated region
    $region34: #{tpu_custom_call.1} parent=1 // pred_check
      _
    $region35: #{tpu_custom_call.1} parent=1 // pred_check_branch
      %172 = sbr.rel (0) target = $region37
    $region36: #{tpu_custom_call.1} parent=1 // pred_region
      %174 = vsyncadd [#allocation4], 0
      %s175 = sshll.u32 [#allocation8], 4
      %s176 = int_to_ptr.vmem [resolvable:$true] %s175
      %s177 = sshll.u32 %s5, 4
      %s178 = int_to_ptr.hbm [resolvable:$true] %s177
      %183 = dma.vmem_to_hbm [thread:$0]  %s176, 256, %s178, [#allocation4], 128, 128, 8
    $region37: #{tpu_custom_call.1} parent=1 // pred_fallthru
      _
    // Predicated region
    $region38: #{tpu_custom_call.1} parent=1 // pred_check
      _
    $region39: #{tpu_custom_call.1} parent=1 // pred_check_branch
      %185 = sbr.rel (0) target = $region41
    $region40: #{tpu_custom_call.1} parent=1 // pred_region
      %187 = dma.done [#allocation4], 256
    $region41: #{tpu_custom_call.1} parent=1 // pred_fallthru
      _
    %188 = vsyncpa [#allocation3], 1
    %189 = vsyncpa [#allocation6], 1
    %190 = vsyncpa [#allocation4], 1

</llo_original>
